<compile_context>
chip_gen: v6e
topology: v6e:2x2x1
jax: 0.10.0
libtpu: 0.0.40
codegen_flags: <defaults>
</compile_context>

<pallas_src>
import functools
import math

import jax
import jax.numpy as jnp
from jax import lax
from jax.experimental import pallas as pl
from jax.experimental.pallas import tpu as pltpu


# ---------------------------------------------------------------------------
# Kernel 1: fused Q|K|V projection (attention scale pre-folded into Q cols).
# ---------------------------------------------------------------------------
def _qkv_proj_kernel(x_ref, wqkv_ref, bqkv_ref, q_ref, k_ref, v_ref):
    d = x_ref.shape[-1]
    x = x_ref[0]                                                # (tt, D) bf16
    qkv = jnp.dot(x, wqkv_ref[...], preferred_element_type=jnp.float32)
    qkv = qkv + bqkv_ref[...]                                   # (tt, 3D) f32
    q_ref[0] = qkv[:, :d].astype(q_ref.dtype)
    k_ref[0] = qkv[:, d:2 * d].astype(k_ref.dtype)
    v_ref[0] = qkv[:, 2 * d:].astype(v_ref.dtype)


# ---------------------------------------------------------------------------
# Kernel 2: flash attention (online softmax over KV tiles) + output proj.
# ---------------------------------------------------------------------------
def _flash_attn_kernel(q_ref, k_ref, v_ref, wp_ref, bp_ref, o_ref,
                       m_sc, l_sc, acc_sc, y_sc, *, n_head, head_dim):
    ki = pl.program_id(2)

    @pl.when(ki == 0)
    def _init():
        m_sc[...] = jnp.full_like(m_sc, -jnp.inf)
        l_sc[...] = jnp.zeros_like(l_sc)
        acc_sc[...] = jnp.zeros_like(acc_sc)

    q = q_ref[0]                                  # (tq, D) bf16 (pre-scaled)
    k = k_ref[0]                                  # (tk, D) bf16
    v = v_ref[0]                                  # (tk, D) bf16

    # Lane-dense (T, D) tiles; static per-head slices.  The live score tile
    # is only (tq, tk) f32 for one head at a time.
    for h in range(n_head):
        lo = h * head_dim
        hi = lo + head_dim
        qh = q[:, lo:hi]                                        # (tq, hd)
        kh = k[:, lo:hi]                                        # (tk, hd)
        vh = v[:, lo:hi]                                        # (tk, hd)

        # Q @ K^T without materializing a transpose (contract last dims).
        s = lax.dot_general(qh, kh, (((1,), (1,)), ((), ())),
                            preferred_element_type=jnp.float32)  # (tq, tk)

        m_prev = m_sc[h]                                        # (tq, 1)
        m_new = jnp.maximum(m_prev, jnp.max(s, axis=-1, keepdims=True))
        alpha = jnp.exp(m_prev - m_new)
        p = jnp.exp(s - m_new)                                  # (tq, tk) f32
        l_sc[h] = alpha * l_sc[h] + jnp.sum(p, axis=-1, keepdims=True)
        acc_sc[h] = alpha * acc_sc[h] + jnp.dot(
            p.astype(jnp.bfloat16), vh, preferred_element_type=jnp.float32)
        m_sc[h] = m_new
        # TODO(synk): attn_drop on p is identity (eval mode).

    @pl.when(ki == pl.num_programs(2) - 1)
    def _finalize():
        # Normalize, merge heads into lane-dense (tq, D) once, then one fused
        # output-projection matmul (full-D contraction keeps the MXU fed).
        for h in range(n_head):
            inv_l = pl.reciprocal(l_sc[h], approx=True)         # (tq, 1)
            y_sc[:, h * head_dim:(h + 1) * head_dim] = (
                acc_sc[h] * inv_l).astype(y_sc.dtype)
        out = jnp.dot(y_sc[...], wp_ref[...],
                      preferred_element_type=jnp.float32)
        o_ref[0] = (out + bp_ref[...]).astype(o_ref.dtype)


# ---------------------------------------------------------------------------
# Wrapper
# ---------------------------------------------------------------------------
def _pick_tile(t, max_tile):
    """Largest multiple-of-8 tile <= max_tile dividing t, else t itself."""
    if t <= max_tile:
        return t
    for c in range(max_tile, 7, -8):
        if t % c == 0:
            return c
    return t


def _vmem_limit_bytes(tq, tk, d, n_head, head_dim):
    """Rough working-set estimate (padded to (8,128) tiles) with 2x headroom."""
    ceil_to = lambda x, m: -(-x // m) * m
    lane = lambda n: ceil_to(max(n, 1), 128)
    sub = lambda n: ceil_to(max(n, 1), 8)
    b = 0
    b += 2 * sub(tq) * lane(d) * 2                      # q block (2 bufs)
    b += 2 * 2 * sub(tk) * lane(d) * 2                  # k + v blocks
    b += 2 * sub(tq) * lane(d) * 4                      # out block (f32)
    b += sub(d) * lane(d) * 2 + lane(d) * 4             # wp + bp (1 buf)
    b += sub(d) * lane(3 * d) * 2 + lane(3 * d) * 4     # wqkv + bqkv (1 buf)
    b += 2 * n_head * sub(tq) * lane(1) * 4             # m, l scratches
    b += n_head * sub(tq) * lane(head_dim) * 4          # acc scratch
    b += sub(tq) * lane(d) * 2                          # merged-head y scratch
    b += 2 * sub(tq) * lane(tk) * 4                     # live s / p tiles
    # 2x margin, floor at the 32 MiB default, stay well under v7x's 64 MiB.
    return int(min(max(2 * b, 32 * 1024 * 1024), 48 * 1024 * 1024))


def _mha_forward(x_bf, wqkv, bqkv, wp, bp, *, n_head, head_dim, out_dtype,
                 tt, tq, tk, vmem_limit, single_buffer_weights):
    B, T, D = x_bf.shape

    def w_spec(shape, index_map):
        # Resident weights: index_map is constant over the grid, so a single
        # VMEM buffer is enough (saves weight VMEM; no re-DMA happens anyway).
        if single_buffer_weights:
            return pl.BlockSpec(shape, index_map, pipeline_mode=pl.Buffered(1))
        return pl.BlockSpec(shape, index_map)

    # ---- Kernel 1: fused QKV projection ---------------------------------
    qkv_call = pl.pallas_call(
        _qkv_proj_kernel,
        out_shape=tuple(jax.ShapeDtypeStruct((B, T, D), jnp.bfloat16)
                        for _ in range(3)),
        grid_spec=pltpu.PrefetchScalarGridSpec(
            num_scalar_prefetch=0,
            grid=(B, T // tt),
            in_specs=[
                pl.BlockSpec((1, tt, D), lambda b, t: (b, t, 0)),
                w_spec((D, 3 * D), lambda b, t: (0, 0)),
                w_spec((1, 3 * D), lambda b, t: (0, 0)),
            ],
            out_specs=tuple(pl.BlockSpec((1, tt, D), lambda b, t: (b, t, 0))
                            for _ in range(3)),
        ),
        compiler_params=pltpu.CompilerParams(
            dimension_semantics=("parallel", "parallel"),
            vmem_limit_bytes=vmem_limit),
    )
    q, k, v = qkv_call(x_bf, wqkv, bqkv)

    # ---- Kernel 2: flash attention + output projection -------------------
    kernel = functools.partial(_flash_attn_kernel,
                               n_head=n_head, head_dim=head_dim)
    flash_call = pl.pallas_call(
        kernel,
        out_shape=jax.ShapeDtypeStruct((B, T, D), out_dtype),
        grid_spec=pltpu.PrefetchScalarGridSpec(
            num_scalar_prefetch=0,
            grid=(B, T // tq, T // tk),
            in_specs=[
                pl.BlockSpec((1, tq, D), lambda b, qi, ki: (b, qi, 0)),
                pl.BlockSpec((1, tk, D), lambda b, qi, ki: (b, ki, 0)),
                pl.BlockSpec((1, tk, D), lambda b, qi, ki: (b, ki, 0)),
                w_spec((D, D), lambda b, qi, ki: (0, 0)),
                w_spec((1, D), lambda b, qi, ki: (0, 0)),
            ],
            out_specs=pl.BlockSpec((1, tq, D), lambda b, qi, ki: (b, qi, 0)),
            scratch_shapes=[
                pltpu.VMEM((n_head, tq, 1), jnp.float32),    # running max  m
                pltpu.VMEM((n_head, tq, 1), jnp.float32),    # running sum  l
                pltpu.VMEM((n_head, tq, head_dim), jnp.float32),  # acc
                pltpu.VMEM((tq, D), jnp.bfloat16),           # merged heads y
            ],
        ),
        compiler_params=pltpu.CompilerParams(
            dimension_semantics=("parallel", "parallel", "arbitrary"),
            vmem_limit_bytes=vmem_limit),
    )
    return flash_call(q, k, v, wp, bp)


def multi_head_attention(x, params, *, n_head, max_tile=256):
    """x: (B, T, D) float32.  params: dict of (D, D) weights & (1, D) biases.

    max_tile: flash q/kv tile size; 256 fills the v6e/v7x 256x256 MXU.
              Use 128 on v5e (4x 128^2 MXU, 16 MiB default scoped VMEM).
    """
    B, T, D = x.shape
    assert D % n_head == 0
    hd = D // n_head
    scale = 1.0 / math.sqrt(hd)

    # bf16 input (halves input DMA); bf16 weights feed the MXU at full rate;
    # the attention scale is folded into the Q projection; Q|K|V are fused
    # into one (D, 3D) matmul operand.  Biases stay f32 (added post-accum).
    x_bf = x.astype(jnp.bfloat16)
    wqkv = jnp.concatenate(
        [params["wq"] * scale, params["wk"], params["wv"]], axis=1
    ).astype(jnp.bfloat16)                                       # (D, 3D)
    bqkv = jnp.concatenate(
        [params["bq"] * scale, params["bk"], params["bv"]], axis=1)  # (1, 3D)
    wp = params["wp"].astype(jnp.bfloat16)                       # (D, D)
    bp = params["bp"]                                            # (1, D) f32

    tt = _pick_tile(T, max_tile)      # token tile for the projection matmul
    tq = _pick_tile(T, max_tile)      # query tile
    tk = _pick_tile(T, max_tile)      # kv tile
    vmem_limit = _vmem_limit_bytes(tq, tk, D, n_head, hd)

    kwargs = dict(n_head=n_head, head_dim=hd, out_dtype=x.dtype,
                  tt=tt, tq=tq, tk=tk, vmem_limit=vmem_limit)
    try:
        return _mha_forward(x_bf, wqkv, bqkv, wp, bp,
                            single_buffer_weights=True, **kwargs)
    except Exception:
        # Fallback for jax versions whose TPU lowering rejects
        # pipeline_mode=pl.Buffered(1) on constant-index weight blocks.
        return _mha_forward(x_bf, wqkv, bqkv, wp, bp,
                            single_buffer_weights=False, **kwargs)


# ---------------------------------------------------------------------------
# Pure-JAX reference (mirrors the PyTorch forward; dropout in eval mode).
# ---------------------------------------------------------------------------
def _reference(x, params, *, n_head):
    B, T, D = x.shape
    hd = D // n_head

    def lin(t, w, b):
        return t @ w + b

    q = lin(x, params["wq"], params["bq"]).reshape(B, T, n_head, hd).transpose(0, 2, 1, 3)
    k = lin(x, params["wk"], params["bk"]).reshape(B, T, n_head, hd).transpose(0, 2, 1, 3)
    v = lin(x, params["wv"], params["bv"]).reshape(B, T, n_head, hd).transpose(0, 2, 1, 3)

    att = jnp.einsum("bhtd,bhsd->bhts", q, k) * (1.0 / math.sqrt(hd))
    att = jax.nn.softmax(att, axis=-1)
    y = jnp.einsum("bhts,bhsd->bhtd", att, v)
    y = y.transpose(0, 2, 1, 3).reshape(B, T, D)
    return lin(y, params["wp"], params["bp"])


def _init_params(key, dim):
    """Deterministic nn.Linear-style init: U(-1/sqrt(dim), 1/sqrt(dim))."""
    bound = 1.0 / math.sqrt(dim)
    keys = jax.random.split(key, 8)

    def u(k, shape):
        return jax.random.uniform(k, shape, jnp.float32, -bound, bound)

    return {
        "wq": u(keys[0], (dim, dim)), "bq": u(keys[1], (1, dim)),
        "wk": u(keys[2], (dim, dim)), "bk": u(keys[3], (1, dim)),
        "wv": u(keys[4], (dim, dim)), "bv": u(keys[5], (1, dim)),
        "wp": u(keys[6], (dim, dim)), "bp": u(keys[7], (1, dim)),
    }


if __name__ == "__main__":
    def _check(B, T, D, NH, tol):
        key = jax.random.PRNGKey(0)
        kx, kp = jax.random.split(key)
        x = jax.random.normal(kx, (B, T, D), jnp.float32)
        params = _init_params(kp, D)
        out = jax.block_until_ready(multi_head_attention(x, params, n_head=NH))
        ref = _reference(x, params, n_head=NH)
        assert out.shape == (B, T, D)
        err = float(jnp.max(jnp.abs(out - ref)))
        # bf16 MXU operands (f32 accumulation) => bf16-level tolerance.
        assert jnp.allclose(out, ref, atol=tol, rtol=tol), err

    # Small shapes consistent with the module (dim divisible by num_heads).
    _check(B=2, T=8, D=32, NH=4, tol=2e-2)
    # Multi-tile flash path: 2 query tiles x 2 kv tiles per batch element.
    _check(B=2, T=512, D=128, NH=8, tol=5e-2)

    print("KERNEL_OK")
</pallas_src>

<mosaic_0001>
module attributes {stable_mosaic.version = 11 : i64} {
  func.func @_qkv_proj_kernel(%arg0: i32, %arg1: i32, %arg2: memref<1x8x32xbf16, #tpu.memory_space<vmem>>, %arg3: memref<32x96xbf16, #tpu.memory_space<vmem>>, %arg4: memref<1x96xf32, #tpu.memory_space<vmem>>, %arg5: memref<1x8x32xbf16, #tpu.memory_space<vmem>>, %arg6: memref<1x8x32xbf16, #tpu.memory_space<vmem>>, %arg7: memref<1x8x32xbf16, #tpu.memory_space<vmem>>) attributes {dimension_semantics = [#tpu.dimension_semantics<parallel>, #tpu.dimension_semantics<parallel>], iteration_bounds = array<i64: 2, 1>, scalar_prefetch = 0 : i64, scratch_operands = 0 : i64, tpu.core_type = #tpu.core_type<tc>, window_params = [{transform_indices = @transform_0, window_bounds = array<i64: 1, 8, 32>}, {pipeline_mode = #tpu.pipeline_mode<synchronous>, transform_indices = @transform_1, window_bounds = array<i64: 32, 96>}, {pipeline_mode = #tpu.pipeline_mode<synchronous>, transform_indices = @transform_2, window_bounds = array<i64: 1, 96>}, {transform_indices = @transform_3, window_bounds = array<i64: 1, 8, 32>}, {transform_indices = @transform_4, window_bounds = array<i64: 1, 8, 32>}, {transform_indices = @transform_5, window_bounds = array<i64: 1, 8, 32>}]} {
    %c0 = arith.constant 0 : index
    %c0_0 = arith.constant 0 : index
    %c0_1 = arith.constant 0 : index
    %0 = vector.load %arg2[%c0, %c0_0, %c0_1] : memref<1x8x32xbf16, #tpu.memory_space<vmem>>, vector<1x8x32xbf16>
    %1 = vector.shape_cast %0 : vector<1x8x32xbf16> to vector<8x32xbf16>
    %c0_2 = arith.constant 0 : index
    %c0_3 = arith.constant 0 : index
    %2 = vector.load %arg3[%c0_2, %c0_3] : memref<32x96xbf16, #tpu.memory_space<vmem>>, vector<32x96xbf16>
    %cst = arith.constant dense<0.000000e+00> : vector<8x96xf32>
    %3 = tpu.matmul %1, %2, %cst {dimension_numbers = #tpu.dot_dimension_numbers<[1], [0], [0], [1], [0, 0, 1, 1], [], []>} : vector<8x32xbf16>, vector<32x96xbf16>, vector<8x96xf32> -> vector<8x96xf32>
    %c0_4 = arith.constant 0 : index
    %c0_5 = arith.constant 0 : index
    %4 = vector.load %arg4[%c0_4, %c0_5] : memref<1x96xf32, #tpu.memory_space<vmem>>, vector<1x96xf32>
    %5 = vector.broadcast %4 : vector<1x96xf32> to vector<8x96xf32>
    %6 = arith.addf %3, %5 : vector<8x96xf32>
    %7 = vector.extract_strided_slice %6 {offsets = [0, 0], sizes = [8, 32], strides = [1, 1]} : vector<8x96xf32> to vector<8x32xf32>
    %8 = arith.truncf %7 : vector<8x32xf32> to vector<8x32xbf16>
    %c0_6 = arith.constant 0 : index
    %c0_7 = arith.constant 0 : index
    %c0_8 = arith.constant 0 : index
    %9 = vector.load %arg5[%c0_6, %c0_7, %c0_8] : memref<1x8x32xbf16, #tpu.memory_space<vmem>>, vector<1x8x32xbf16>
    %10 = vector.shape_cast %9 : vector<1x8x32xbf16> to vector<8x32xbf16>
    %11 = vector.shape_cast %8 : vector<8x32xbf16> to vector<1x8x32xbf16>
    tpu.vector_store %arg5[%c0_6, %c0_7, %c0_8], %11 {strides = array<i32>} : memref<1x8x32xbf16, #tpu.memory_space<vmem>>, vector<1x8x32xbf16>,
    %12 = vector.extract_strided_slice %6 {offsets = [0, 32], sizes = [8, 32], strides = [1, 1]} : vector<8x96xf32> to vector<8x32xf32>
    %13 = arith.truncf %12 : vector<8x32xf32> to vector<8x32xbf16>
    %c0_9 = arith.constant 0 : index
    %c0_10 = arith.constant 0 : index
    %c0_11 = arith.constant 0 : index
    %14 = vector.load %arg6[%c0_9, %c0_10, %c0_11] : memref<1x8x32xbf16, #tpu.memory_space<vmem>>, vector<1x8x32xbf16>
    %15 = vector.shape_cast %14 : vector<1x8x32xbf16> to vector<8x32xbf16>
    %16 = vector.shape_cast %13 : vector<8x32xbf16> to vector<1x8x32xbf16>
    tpu.vector_store %arg6[%c0_9, %c0_10, %c0_11], %16 {strides = array<i32>} : memref<1x8x32xbf16, #tpu.memory_space<vmem>>, vector<1x8x32xbf16>,
    %17 = vector.extract_strided_slice %6 {offsets = [0, 64], sizes = [8, 32], strides = [1, 1]} : vector<8x96xf32> to vector<8x32xf32>
    %18 = arith.truncf %17 : vector<8x32xf32> to vector<8x32xbf16>
    %c0_12 = arith.constant 0 : index
    %c0_13 = arith.constant 0 : index
    %c0_14 = arith.constant 0 : index
    %19 = vector.load %arg7[%c0_12, %c0_13, %c0_14] : memref<1x8x32xbf16, #tpu.memory_space<vmem>>, vector<1x8x32xbf16>
    %20 = vector.shape_cast %19 : vector<1x8x32xbf16> to vector<8x32xbf16>
    %21 = vector.shape_cast %18 : vector<8x32xbf16> to vector<1x8x32xbf16>
    tpu.vector_store %arg7[%c0_12, %c0_13, %c0_14], %21 {strides = array<i32>} : memref<1x8x32xbf16, #tpu.memory_space<vmem>>, vector<1x8x32xbf16>,
    return
  }
  func.func @transform_0(%arg0: i32, %arg1: i32) -> (i32, i32, i32) {
    %c0_i32 = arith.constant 0 : i32
    %c0_i32_0 = arith.constant 0 : i32
    return %arg0, %arg1, %c0_i32 : i32, i32, i32
  }
  func.func @transform_1(%arg0: i32, %arg1: i32) -> (i32, i32) {
    %c0_i32 = arith.constant 0 : i32
    %c0_i32_0 = arith.constant 0 : i32
    %c0_i32_1 = arith.constant 0 : i32
    return %c0_i32, %c0_i32_0 : i32, i32
  }
  func.func @transform_2(%arg0: i32, %arg1: i32) -> (i32, i32) {
    %c0_i32 = arith.constant 0 : i32
    %c0_i32_0 = arith.constant 0 : i32
    %c0_i32_1 = arith.constant 0 : i32
    return %c0_i32, %c0_i32_0 : i32, i32
  }
  func.func @transform_3(%arg0: i32, %arg1: i32) -> (i32, i32, i32) {
    %c0_i32 = arith.constant 0 : i32
    %c0_i32_0 = arith.constant 0 : i32
    return %arg0, %arg1, %c0_i32 : i32, i32, i32
  }
  func.func @transform_4(%arg0: i32, %arg1: i32) -> (i32, i32, i32) {
    %c0_i32 = arith.constant 0 : i32
    %c0_i32_0 = arith.constant 0 : i32
    return %arg0, %arg1, %c0_i32 : i32, i32, i32
  }
  func.func @transform_5(%arg0: i32, %arg1: i32) -> (i32, i32, i32) {
    %c0_i32 = arith.constant 0 : i32
    %c0_i32_0 = arith.constant 0 : i32
    return %arg0, %arg1, %c0_i32 : i32, i32, i32
  }
}

module attributes {stable_mosaic.version = 11 : i64} {
  func.func @_qkv_proj_kernel(%arg0: i32, %arg1: i32, %arg2: memref<1x8x32xbf16, #tpu.memory_space<vmem>>, %arg3: memref<32x96xbf16, #tpu.memory_space<vmem>>, %arg4: memref<1x96xf32, #tpu.memory_space<vmem>>, %arg5: memref<1x8x32xbf16, #tpu.memory_space<vmem>>, %arg6: memref<1x8x32xbf16, #tpu.memory_space<vmem>>, %arg7: memref<1x8x32xbf16, #tpu.memory_space<vmem>>) attributes {dimension_semantics = [#tpu.dimension_semantics<parallel>, #tpu.dimension_semantics<parallel>], iteration_bounds = array<i64: 2, 1>, scalar_prefetch = 0 : i64, scratch_operands = 0 : i64, tpu.core_type = #tpu.core_type<tc>, window_params = [{transform_indices = @transform_0, window_bounds = array<i64: 1, 8, 32>}, {pipeline_mode = #tpu.pipeline_mode<synchronous>, transform_indices = @transform_1, window_bounds = array<i64: 32, 96>}, {pipeline_mode = #tpu.pipeline_mode<synchronous>, transform_indices = @transform_2, window_bounds = array<i64: 1, 96>}, {transform_indices = @transform_3, window_bounds = array<i64: 1, 8, 32>}, {transform_indices = @transform_4, window_bounds = array<i64: 1, 8, 32>}, {transform_indices = @transform_5, window_bounds = array<i64: 1, 8, 32>}]} {
    %c0 = arith.constant 0 : index
    %c0_0 = arith.constant 0 : index
    %c0_1 = arith.constant 0 : index
    %0 = vector.load %arg2[%c0, %c0_0, %c0_1] : memref<1x8x32xbf16, #tpu.memory_space<vmem>>, vector<1x8x32xbf16>
    %1 = vector.shape_cast %0 : vector<1x8x32xbf16> to vector<8x32xbf16>
    %c0_2 = arith.constant 0 : index
    %c0_3 = arith.constant 0 : index
    %2 = vector.load %arg3[%c0_2, %c0_3] : memref<32x96xbf16, #tpu.memory_space<vmem>>, vector<32x96xbf16>
    %cst = arith.constant dense<0.000000e+00> : vector<8x96xf32>
    %3 = tpu.matmul %1, %2, %cst {dimension_numbers = #tpu.dot_dimension_numbers<[1], [0], [0], [1], [0, 0, 1, 1], [], []>} : vector<8x32xbf16>, vector<32x96xbf16>, vector<8x96xf32> -> vector<8x96xf32>
    %c0_4 = arith.constant 0 : index
    %c0_5 = arith.constant 0 : index
    %4 = vector.load %arg4[%c0_4, %c0_5] : memref<1x96xf32, #tpu.memory_space<vmem>>, vector<1x96xf32>
    %5 = vector.broadcast %4 : vector<1x96xf32> to vector<8x96xf32>
    %6 = arith.addf %3, %5 : vector<8x96xf32>
    %7 = vector.extract_strided_slice %6 {offsets = [0, 0], sizes = [8, 32], strides = [1, 1]} : vector<8x96xf32> to vector<8x32xf32>
    %8 = arith.truncf %7 : vector<8x32xf32> to vector<8x32xbf16>
    %c0_6 = arith.constant 0 : index
    %c0_7 = arith.constant 0 : index
    %c0_8 = arith.constant 0 : index
    %9 = vector.load %arg5[%c0_6, %c0_7, %c0_8] : memref<1x8x32xbf16, #tpu.memory_space<vmem>>, vector<1x8x32xbf16>
    %10 = vector.shape_cast %9 : vector<1x8x32xbf16> to vector<8x32xbf16>
    %11 = vector.shape_cast %8 : vector<8x32xbf16> to vector<1x8x32xbf16>
    tpu.vector_store %arg5[%c0_6, %c0_7, %c0_8], %11 {strides = array<i32>} : memref<1x8x32xbf16, #tpu.memory_space<vmem>>, vector<1x8x32xbf16>,
    %12 = vector.extract_strided_slice %6 {offsets = [0, 32], sizes = [8, 32], strides = [1, 1]} : vector<8x96xf32> to vector<8x32xf32>
    %13 = arith.truncf %12 : vector<8x32xf32> to vector<8x32xbf16>
    %c0_9 = arith.constant 0 : index
    %c0_10 = arith.constant 0 : index
    %c0_11 = arith.constant 0 : index
    %14 = vector.load %arg6[%c0_9, %c0_10, %c0_11] : memref<1x8x32xbf16, #tpu.memory_space<vmem>>, vector<1x8x32xbf16>
    %15 = vector.shape_cast %14 : vector<1x8x32xbf16> to vector<8x32xbf16>
    %16 = vector.shape_cast %13 : vector<8x32xbf16> to vector<1x8x32xbf16>
    tpu.vector_store %arg6[%c0_9, %c0_10, %c0_11], %16 {strides = array<i32>} : memref<1x8x32xbf16, #tpu.memory_space<vmem>>, vector<1x8x32xbf16>,
    %17 = vector.extract_strided_slice %6 {offsets = [0, 64], sizes = [8, 32], strides = [1, 1]} : vector<8x96xf32> to vector<8x32xf32>
    %18 = arith.truncf %17 : vector<8x32xf32> to vector<8x32xbf16>
    %c0_12 = arith.constant 0 : index
    %c0_13 = arith.constant 0 : index
    %c0_14 = arith.constant 0 : index
    %19 = vector.load %arg7[%c0_12, %c0_13, %c0_14] : memref<1x8x32xbf16, #tpu.memory_space<vmem>>, vector<1x8x32xbf16>
    %20 = vector.shape_cast %19 : vector<1x8x32xbf16> to vector<8x32xbf16>
    %21 = vector.shape_cast %18 : vector<8x32xbf16> to vector<1x8x32xbf16>
    tpu.vector_store %arg7[%c0_12, %c0_13, %c0_14], %21 {strides = array<i32>} : memref<1x8x32xbf16, #tpu.memory_space<vmem>>, vector<1x8x32xbf16>,
    return
  }
  func.func @transform_0(%arg0: i32, %arg1: i32) -> (i32, i32, i32) {
    %c0_i32 = arith.constant 0 : i32
    %c0_i32_0 = arith.constant 0 : i32
    return %arg0, %arg1, %c0_i32 : i32, i32, i32
  }
  func.func @transform_1(%arg0: i32, %arg1: i32) -> (i32, i32) {
    %c0_i32 = arith.constant 0 : i32
    %c0_i32_0 = arith.constant 0 : i32
    %c0_i32_1 = arith.constant 0 : i32
    return %c0_i32, %c0_i32_0 : i32, i32
  }
  func.func @transform_2(%arg0: i32, %arg1: i32) -> (i32, i32) {
    %c0_i32 = arith.constant 0 : i32
    %c0_i32_0 = arith.constant 0 : i32
    %c0_i32_1 = arith.constant 0 : i32
    return %c0_i32, %c0_i32_0 : i32, i32
  }
  func.func @transform_3(%arg0: i32, %arg1: i32) -> (i32, i32, i32) {
    %c0_i32 = arith.constant 0 : i32
    %c0_i32_0 = arith.constant 0 : i32
    return %arg0, %arg1, %c0_i32 : i32, i32, i32
  }
  func.func @transform_4(%arg0: i32, %arg1: i32) -> (i32, i32, i32) {
    %c0_i32 = arith.constant 0 : i32
    %c0_i32_0 = arith.constant 0 : i32
    return %arg0, %arg1, %c0_i32 : i32, i32, i32
  }
  func.func @transform_5(%arg0: i32, %arg1: i32) -> (i32, i32, i32) {
    %c0_i32 = arith.constant 0 : i32
    %c0_i32_0 = arith.constant 0 : i32
    return %arg0, %arg1, %c0_i32 : i32, i32, i32
  }
}

</mosaic_0001>

<llo_original>
// kernel: tpu_custom_call.1
$region0: #{tpu_custom_call.1}
  #allocation0 [shape = 'u32[]', space=smem, size = 0x4, offset = 0x4, fixed_abs, tag = 'smem constant byte address 0x4 - core index']
  #allocation1 [shape = 'u32[144,128]{1,0:T(1,128)}', space=vmem, size = 0x12000, scoped, tag = 'internal scratch']
  %s0 = inlined_call_operand.hbm [shape: bf16[2,8,32], index: 0, kind: input, shape index: {}]
  %s1 = inlined_call_operand.hbm [shape: bf16[32,96], index: 1, kind: input, shape index: {}]
  %s2 = inlined_call_operand.vmem [shape: f32[1,96], index: 2, kind: input, shape index: {}]
  %s3 = inlined_call_operand.hbm [shape: bf16[2,8,32], index: 3, kind: output, shape index: {0}]
  %s4 = inlined_call_operand.hbm [shape: bf16[2,8,32], index: 4, kind: output, shape index: {1}]
  %s5 = inlined_call_operand.hbm [shape: bf16[2,8,32], index: 5, kind: output, shape index: {2}]
  %6 = xla_tuple %s3, %s4, %s5
  %s7 = sld [smem:[#allocation0]]
  $region69: #{tpu_custom_call.1} parent=0
    _
  %s9 = ssub.s32 1, %s7
  %s10 = scalar_select 0, %s9, %s7
  $region1: #{tpu_custom_call.1} parent=0
    #allocation2 [shape = 'u8[4096]{0}', space=vmem, size = 0x1000, scoped, tag = 'input window, operand 0']
    #allocation3 [shape = 's32[2]{0}', space=sflag, size = 0x8, scoped, tag = 'scoped memory for tpu_custom_call.1']
    #allocation4 [shape = 's32[2]{0}', space=sflag, size = 0x8, scoped, tag = 'scoped memory for tpu_custom_call.1']
    #allocation5 [shape = 'u8[8192]{0}', space=vmem, size = 0x2000, scoped, tag = 'input window, operand 1, single buffered']
    #allocation6 [shape = 's32[1]{0}', space=sflag, size = 0x4, scoped, tag = 'scoped memory for tpu_custom_call.1']
    #allocation7 [shape = 'u8[4096]{0}', space=vmem, size = 0x1000, scoped, tag = 'output window, operand 0']
    #allocation8 [shape = 'u8[4096]{0}', space=vmem, size = 0x1000, scoped, tag = 'output window, operand 1']
    #allocation9 [shape = 's32[2]{0}', space=sflag, size = 0x8, scoped, tag = 'scoped memory for tpu_custom_call.1']
    #allocation10 [shape = 'u8[4096]{0}', space=vmem, size = 0x1000, scoped, tag = 'output window, operand 2']
    %11 = vsyncpa [#allocation3], 0
    %s12 = scalar_lea.sflag [#allocation3], 1
    %13 = vsyncpa %s12, 0
    %14 = vsyncpa [#allocation6], 0
    %15 = vsyncpa [#allocation4], 0
    %s16 = scalar_lea.sflag [#allocation4], 1
    %17 = vsyncpa %s16, 0
    %18 = vsyncpa [#allocation9], 0
    %s19 = scalar_lea.sflag [#allocation9], 1
    %20 = vsyncpa %s19, 0
    loop: start=0, step=1, limit=4
    $region2: #{tpu_custom_call.1} parent=1 // loop_pre_header
      _
    $region3: #{tpu_custom_call.1} parent=1 // loop_header
      %s22 = sphi 0, %s26
      %p23 = scmp.ge.s32.totalorder %s22, 4
      %s29 = sphi 0, %s41
      %s30 = sphi 0, %s37
      %s31 = sphi 0, %s29
      %s32 = sphi 0, %s30
      %s33 = sphi 0, %s31
      %s34 = sphi 0, %s32
      %s46 = sphi 0, %s48
      %s49 = sphi 0, %s46
      %s50 = sphi 0, %s49
      %s66 = sphi 0, %s50
      %s70 = sphi 0, %s70
      %s72 = sphi 0, %s70
      %s73 = sphi 0, %s72
      %s87 = sphi 0, %s73
      %s91 = sphi 0, %s91
      %s93 = sphi 0, %s91
      %s94 = sphi 0, %s93
      %s108 = sphi 0, %s94
      %s116 = sphi 0, %s118
      %s119 = sphi 0, %s116
      %s120 = sphi 0, %s119
      %s136 = sphi 0, %s120
      %s144 = sphi 0, %s146
      %s147 = sphi 0, %s144
      %s148 = sphi 0, %s147
      %s164 = sphi 0, %s148
      %s172 = sphi 0, %s174
      %s175 = sphi 0, %s172
      %s176 = sphi 0, %s175
      %s192 = sphi 0, %s176
    $region4: #{tpu_custom_call.1} parent=1 // loop_header_branch
      %25 = sbr.rel (%p23) target = $region8
    $region5: #{tpu_custom_call.1} parent=1 // loop_body
      %s27 = ssub.s32 %s22, 1
      %s28 = ssub.s32 %s22, 2
      %s35 = sadd.s32 1, %s30
      %p36 = scmp.ge.s32.totalorder %s35, 1
      %s37 = scalar_select %p36, 0, %s35
      %s38 = sadd.s32 1, %s29
      %s39 = scalar_select %p36, %s38, %s29
      %p40 = scmp.ge.s32.totalorder %s39, 2
      %s41 = scalar_select %p40, 0, %s39
      %s42 = ssub.s32 %s29, %s41
      %s43 = ssub.s32 %s30, %s37
      %s44 = sor.u32 %s42, %s43
      %p45 = scmp.eq.s32.totalorder %s44, 0
      %s47 = sadd.s32 %s46, 1
      %s48 = scalar_select %p45, %s46, %s47
      %p51 = pneg %p45
      %p52 = scmp.eq.s32.totalorder %s22, 1
      %p53 = por %p51, %p52
      %p54 = scmp.ne.s32.totalorder %s46, %s49
      %p55 = scmp.eq.s32.totalorder %s22, 0
      %p56 = por %p54, %p55
      %p57 = scmp.ne.s32.totalorder %s46, %s49
      %p58 = scmp.eq.s32.totalorder %s27, 1
      %p59 = por %p57, %p58
      %p60 = scmp.ne.s32.totalorder %s49, %s50
      %p61 = scmp.eq.s32.totalorder %s27, 0
      %p62 = por %p60, %p61
      %p63 = scmp.ne.s32.totalorder %s49, %s50
      %p64 = scmp.eq.s32.totalorder %s28, 1
      %p65 = por %p63, %p64
      %p67 = scmp.ne.s32.totalorder %s50, %s66
      %p68 = scmp.eq.s32.totalorder %s28, 0
      %p69 = por %p67, %p68
      %s71 = sadd.s32 %s70, 1
      %p74 = scmp.eq.s32.totalorder %s22, 1
      %p75 = scmp.ne.s32.totalorder %s70, %s72
      %p76 = scmp.eq.s32.totalorder %s22, 0
      %p77 = por %p75, %p76
      %p78 = scmp.ne.s32.totalorder %s70, %s72
      %p79 = scmp.eq.s32.totalorder %s27, 1
      %p80 = por %p78, %p79
      %p81 = scmp.ne.s32.totalorder %s72, %s73
      %p82 = scmp.eq.s32.totalorder %s27, 0
      %p83 = por %p81, %p82
      %p84 = scmp.ne.s32.totalorder %s72, %s73
      %p85 = scmp.eq.s32.totalorder %s28, 1
      %p86 = por %p84, %p85
      %p88 = scmp.ne.s32.totalorder %s73, %s87
      %p89 = scmp.eq.s32.totalorder %s28, 0
      %p90 = por %p88, %p89
      %s92 = sadd.s32 %s91, 1
      %p95 = scmp.eq.s32.totalorder %s22, 1
      %p96 = scmp.ne.s32.totalorder %s91, %s93
      %p97 = scmp.eq.s32.totalorder %s22, 0
      %p98 = por %p96, %p97
      %p99 = scmp.ne.s32.totalorder %s91, %s93
      %p100 = scmp.eq.s32.totalorder %s27, 1
      %p101 = por %p99, %p100
      %p102 = scmp.ne.s32.totalorder %s93, %s94
      %p103 = scmp.eq.s32.totalorder %s27, 0
      %p104 = por %p102, %p103
      %p105 = scmp.ne.s32.totalorder %s93, %s94
      %p106 = scmp.eq.s32.totalorder %s28, 1
      %p107 = por %p105, %p106
      %p109 = scmp.ne.s32.totalorder %s94, %s108
      %p110 = scmp.eq.s32.totalorder %s28, 0
      %p111 = por %p109, %p110
      %s112 = ssub.s32 %s29, %s41
      %s113 = ssub.s32 %s30, %s37
      %s114 = sor.u32 %s112, %s113
      %p115 = scmp.eq.s32.totalorder %s114, 0
      %s117 = sadd.s32 %s116, 1
      %s118 = scalar_select %p115, %s116, %s117
      %p121 = pneg %p115
      %p122 = scmp.eq.s32.totalorder %s22, 1
      %p123 = por %p121, %p122
      %p124 = scmp.ne.s32.totalorder %s116, %s119
      %p125 = scmp.eq.s32.totalorder %s22, 0
      %p126 = por %p124, %p125
      %p127 = scmp.ne.s32.totalorder %s116, %s119
      %p128 = scmp.eq.s32.totalorder %s27, 1
      %p129 = por %p127, %p128
      %p130 = scmp.ne.s32.totalorder %s119, %s120
      %p131 = scmp.eq.s32.totalorder %s27, 0
      %p132 = por %p130, %p131
      %p133 = scmp.ne.s32.totalorder %s119, %s120
      %p134 = scmp.eq.s32.totalorder %s28, 1
      %p135 = por %p133, %p134
      %p137 = scmp.ne.s32.totalorder %s120, %s136
      %p138 = scmp.eq.s32.totalorder %s28, 0
      %p139 = por %p137, %p138
      %s140 = ssub.s32 %s29, %s41
      %s141 = ssub.s32 %s30, %s37
      %s142 = sor.u32 %s140, %s141
      %p143 = scmp.eq.s32.totalorder %s142, 0
      %s145 = sadd.s32 %s144, 1
      %s146 = scalar_select %p143, %s144, %s145
      %p149 = pneg %p143
      %p150 = scmp.eq.s32.totalorder %s22, 1
      %p151 = por %p149, %p150
      %p152 = scmp.ne.s32.totalorder %s144, %s147
      %p153 = scmp.eq.s32.totalorder %s22, 0
      %p154 = por %p152, %p153
      %p155 = scmp.ne.s32.totalorder %s144, %s147
      %p156 = scmp.eq.s32.totalorder %s27, 1
      %p157 = por %p155, %p156
      %p158 = scmp.ne.s32.totalorder %s147, %s148
      %p159 = scmp.eq.s32.totalorder %s27, 0
      %p160 = por %p158, %p159
      %p161 = scmp.ne.s32.totalorder %s147, %s148
      %p162 = scmp.eq.s32.totalorder %s28, 1
      %p163 = por %p161, %p162
      %p165 = scmp.ne.s32.totalorder %s148, %s164
      %p166 = scmp.eq.s32.totalorder %s28, 0
      %p167 = por %p165, %p166
      %s168 = ssub.s32 %s29, %s41
      %s169 = ssub.s32 %s30, %s37
      %s170 = sor.u32 %s168, %s169
      %p171 = scmp.eq.s32.totalorder %s170, 0
      %s173 = sadd.s32 %s172, 1
      %s174 = scalar_select %p171, %s172, %s173
      %p177 = pneg %p171
      %p178 = scmp.eq.s32.totalorder %s22, 1
      %p179 = por %p177, %p178
      %p180 = scmp.ne.s32.totalorder %s172, %s175
      %p181 = scmp.eq.s32.totalorder %s22, 0
      %p182 = por %p180, %p181
      %p183 = scmp.ne.s32.totalorder %s172, %s175
      %p184 = scmp.eq.s32.totalorder %s27, 1
      %p185 = por %p183, %p184
      %p186 = scmp.ne.s32.totalorder %s175, %s176
      %p187 = scmp.eq.s32.totalorder %s27, 0
      %p188 = por %p186, %p187
      %p189 = scmp.ne.s32.totalorder %s175, %s176
      %p190 = scmp.eq.s32.totalorder %s28, 1
      %p191 = por %p189, %p190
      %p193 = scmp.ne.s32.totalorder %s176, %s192
      %p194 = scmp.eq.s32.totalorder %s28, 0
      %p195 = por %p193, %p194
      %p196 = scmp.le.s32.totalorder 1, %s22
      %p197 = scmp.lt.s32.totalorder %s22, 3
      %p198 = pnand %p196, %p197
      %p199 = pneg %p198
      // Predicated region
      $region9: #{tpu_custom_call.1} parent=5 // pred_check
        _
      $region10: #{tpu_custom_call.1} parent=5 // pred_check_branch
        %201 = sbr.rel (%p198) target = $region12
      $region11: #{tpu_custom_call.1} parent=5 // pred_region
        %s202 = ssub.s32 %s22, 1
        // Predicated region
        $region13: #{tpu_custom_call.1} parent=11 // pred_check
          %p203 = pneg %p83
        $region14: #{tpu_custom_call.1} parent=11 // pred_check_branch
          %205 = sbr.rel (%p203) target = $region16
        $region15: #{tpu_custom_call.1} parent=11 // pred_region
          %s207 = ssub.s32 256, 256
          %208 = vsyncadd [#allocation6], %s207
          %s209 = sshll.u32 [#allocation5], 4
          %s210 = int_to_ptr.vmem [resolvable:$true] %s209
          %215 = dma.hbm_to_vmem [thread:$0]  %s1, 256, %s210, [#allocation6], 64, 64, 4
        $region16: #{tpu_custom_call.1} parent=11 // pred_fallthru
          _
        // Predicated region
        $region17: #{tpu_custom_call.1} parent=11 // pred_check
          %p216 = pneg %p104
        $region18: #{tpu_custom_call.1} parent=11 // pred_check_branch
          %218 = sbr.rel (%p216) target = $region20
        $region19: #{tpu_custom_call.1} parent=11 // pred_region
          _
        $region20: #{tpu_custom_call.1} parent=11 // pred_fallthru
          _
      $region12: #{tpu_custom_call.1} parent=5 // pred_fallthru
        _
      %p219 = scmp.lt.s32.totalorder %s22, 2
      // Predicated region
      $region21: #{tpu_custom_call.1} parent=5 // pred_check
        %p220 = pneg %p219
      $region22: #{tpu_custom_call.1} parent=5 // pred_check_branch
        %222 = sbr.rel (%p220) target = $region24
      $region23: #{tpu_custom_call.1} parent=5 // pred_region
        // Predicated region
        $region25: #{tpu_custom_call.1} parent=23 // pred_check
          %p223 = pneg %p56
        $region26: #{tpu_custom_call.1} parent=23 // pred_check_branch
          %225 = sbr.rel (%p223) target = $region28
        $region27: #{tpu_custom_call.1} parent=23 // pred_region
          %s226 = sand.u32 %s46, 1
          %s227 = scalar_lea.sflag [#allocation3], %s226
          %s228 = sand.u32 %s46, 1
          %s229 = smul.addr %s228, 4
          %s230 = scalar_lea.vmem [#allocation2], %s229
          %s232 = ssub.s32 64, 64
          %233 = vsyncadd %s227, %s232
          %s234 = sadd.s32 %s30, %s29
          %s235 = smul.addr %s234, 64
          %s236 = scalar_lea.hbm %s0, %s235
          %s238 = sshll.u32 %s230, 4
          %s239 = int_to_ptr.vmem [resolvable:$true] %s238
          %241 = dma.hbm_to_vmem [thread:$0]  %s236, 64, %s239, %s227
        $region28: #{tpu_custom_call.1} parent=23 // pred_fallthru
          _
      $region24: #{tpu_custom_call.1} parent=5 // pred_fallthru
        _
      %p242 = scmp.le.s32.totalorder 1, %s22
      %p243 = scmp.lt.s32.totalorder %s22, 3
      %p244 = pnand %p242, %p243
      %p245 = pneg %p244
      // Predicated region
      $region29: #{tpu_custom_call.1} parent=5 // pred_check
        _
      $region30: #{tpu_custom_call.1} parent=5 // pred_check_branch
        %247 = sbr.rel (%p244) target = $region32
      $region31: #{tpu_custom_call.1} parent=5 // pred_region
        %s248 = ssub.s32 %s22, 1
        %s249 = sand.u32 %s49, 1
        %s250 = scalar_lea.sflag [#allocation3], %s249
        %s251 = sand.u32 %s49, 1
        %s252 = smul.addr %s251, 4
        %s253 = scalar_lea.vmem [#allocation2], %s252
        // Predicated region
        $region33: #{tpu_custom_call.1} parent=31 // pred_check
          %p254 = pneg %p62
        $region34: #{tpu_custom_call.1} parent=31 // pred_check_branch
          %256 = sbr.rel (%p254) target = $region36
        $region35: #{tpu_custom_call.1} parent=31 // pred_region
          %257 = dma.done %s250, 64
        $region36: #{tpu_custom_call.1} parent=31 // pred_fallthru
          _
        // Predicated region
        $region37: #{tpu_custom_call.1} parent=31 // pred_check
          %p258 = pneg %p83
        $region38: #{tpu_custom_call.1} parent=31 // pred_check_branch
          %260 = sbr.rel (%p258) target = $region40
        $region39: #{tpu_custom_call.1} parent=31 // pred_region
          %261 = dma.done [#allocation6], 256
        $region40: #{tpu_custom_call.1} parent=31 // pred_fallthru
          _
        %s262 = sand.u32 %s49, 1
        %s263 = scalar_lea.sflag [#allocation3], %s262
        %s264 = sand.u32 %s49, 1
        %s265 = smul.addr %s264, 4
        %s266 = scalar_lea.vmem [#allocation2], %s265
        %p267 = pneg %p62
        %p268 = pneg %p59
        %p269 = pneg %p83
        %p270 = pneg %p80
        %p271 = pneg %p104
        %p272 = pneg %p101
        %p273 = pneg %p132
        %p274 = pneg %p129
        %s275 = sand.u32 %s119, 1
        %s276 = scalar_lea.sflag [#allocation4], %s275
        %s277 = sand.u32 %s119, 1
        %s278 = smul.addr %s277, 4
        %s279 = scalar_lea.vmem [#allocation7], %s278
        %p280 = pneg %p160
        %p281 = pneg %p157
        %s282 = sand.u32 %s27, 1
        %s283 = scalar_lea.sflag [#allocation9], %s282
        %s284 = sand.u32 %s147, 1
        %s285 = smul.addr %s284, 4
        %s286 = scalar_lea.vmem [#allocation8], %s285
        %p287 = pneg %p188
        %p288 = pneg %p185
        %s289 = sand.u32 %s27, 1
        %s290 = scalar_lea.sflag [#allocation9], %s289
        %s291 = sand.u32 %s175, 1
        %s292 = smul.addr %s291, 4
        %s293 = scalar_lea.vmem [#allocation10], %s292
        %v295 = vld [vmem:[%s253] sm:$0xf]
        %v296 = vld [vmem:[#allocation5] sm:$0xf]
        %v297 = vld [vmem:[#allocation5 + $0x4] sm:$0xf]
        %v298 = vld [vmem:[#allocation5 + $0x8] sm:$0xf]
        %v299 = vld [vmem:[#allocation5 + $0xc] sm:$0xf]
        %v300 = vld [vmem:[%s2] sm:$0x1]
        %v302 = vlaneseq
        %v303 = vshrl.u32 %v302, 7
        %v304 = vsub.s32 0, %v303
        %v305 = vrot.slane %v300, %v304
        %v311 = vunpack.c.l.b16 %v296
        %v312 = vunpack.c.l.b16 %v297
        %v313 = vunpack.c.l.b16 %v298
        %v314 = vunpack.c.l.b16 %v299
        %v315 = vpack.c.b16 %v312, %v311
        %v316 = vpack.c.b16 %v314, %v313
        %vm319 = vcmask 261120
        %v321 = vsel %vm319, %v295, 0
        %323 = vmatprep.subr.bf16.mxu0 0
        %324 = vmatpush1.bf16.msra.mxu0 0
        %325 = vmatprep.subr.bf16.mxu0 0
        %326 = vmatpush1.bf16.msra.mxu0 0
        %327 = vmatprep.subr.bf16.mxu0 0
        %328 = vmatpush1.bf16.msra.mxu0 0
        %329 = vmatprep.subr.bf16.mxu0 0
        %330 = vmatpush1.bf16.msra.mxu0 0
        %331 = vmatprep.subr.bf16.mxu0 0
        %332 = vmatpush1.bf16.msra.mxu0 0
        %333 = vmatprep.subr.bf16.mxu0 0
        %334 = vmatpush1.bf16.msra.mxu0 0
        %335 = vmatprep.subr.bf16.mxu0 0
        %336 = vmatpush1.bf16.msra.mxu0 %v316
        %337 = vmatprep.subr.bf16.mxu0 0
        %338 = vmatpush1.bf16.msra.mxu0 %v315
        %339 = vmatprep.subr.bf16.mxu0 0
        %340 = vmatpush2.bf16.msra.mxu0 0
        %341 = vmatprep.subr.bf16.mxu0 0
        %342 = vmatpush2.bf16.msra.mxu0 0
        %343 = vmatprep.subr.bf16.mxu0 0
        %344 = vmatpush2.bf16.msra.mxu0 0
        %345 = vmatprep.subr.bf16.mxu0 0
        %346 = vmatpush2.bf16.msra.mxu0 0
        %347 = vmatprep.subr.bf16.mxu0 0
        %348 = vmatpush2.bf16.msra.mxu0 0
        %349 = vmatprep.subr.bf16.mxu0 0
        %350 = vmatpush2.bf16.msra.mxu0 0
        %351 = vmatprep.subr.bf16.mxu0 0
        %352 = vmatpush2.bf16.msra.mxu0 0
        %353 = vmatprep.subr.bf16.mxu0 0
        %354 = vmatpush2.bf16.msra.mxu0 0
        %355 = vmatprep.mubr.bf16.mxu0 0
        %356 = vmatmul.mubr.bf16.gmra.mxu0 %v321
        %v357 = vpop.f32.mrf.mxu0
        %v358 = vadd.f32 %v305, %v357
        %v359 = vpop.f32.mrf.mxu0
        %v360 = vpop.f32.mrf.mxu0
        %v361 = vpop.f32.mrf.mxu0
        %362 = vdwg.mxu0
        %v363 = vpack.c.bf16 %v358, %v358
        %vm364 = vcmask 257024
        %365 = vst.msk [vmem:[%s279] sm:$0xf] %vm364, %v363
        %v367 = vunpack.c.l.b16 %v363
        %v368 = vpack.c.b16 %v367, %v367
        %369 = vrot.lane.b32.xlu0 %v368, 96
        %v370 = vpop.permute.xlu0 %369
        %372 = vst.msk [vmem:[%s286] sm:$0xf] %vm364, %v370
        %373 = vrot.lane.b32.xlu0 %v368, 64
        %v374 = vpop.permute.xlu0 %373
        %376 = vst.msk [vmem:[%s293] sm:$0xf] %vm364, %v374
        %s377 = sand.u32 %s119, 1
        %s378 = scalar_lea.sflag [#allocation4], %s377
        %s379 = sand.u32 %s119, 1
        %s380 = smul.addr %s379, 4
        %s381 = scalar_lea.vmem [#allocation7], %s380
        %s382 = sand.u32 %s27, 1
        %s383 = scalar_lea.sflag [#allocation9], %s382
        %s384 = sand.u32 %s147, 1
        %s385 = smul.addr %s384, 4
        %s386 = scalar_lea.vmem [#allocation8], %s385
        %s387 = sand.u32 %s27, 1
        %s388 = scalar_lea.sflag [#allocation9], %s387
        %s389 = sand.u32 %s175, 1
        %s390 = smul.addr %s389, 4
        %s391 = scalar_lea.vmem [#allocation10], %s390
        // Predicated region
        $region41: #{tpu_custom_call.1} parent=31 // pred_check
          %p392 = pneg %p129
        $region42: #{tpu_custom_call.1} parent=31 // pred_check_branch
          %394 = sbr.rel (%p392) target = $region44
        $region43: #{tpu_custom_call.1} parent=31 // pred_region
          %s396 = ssub.s32 64, 64
          %397 = vsyncadd %s378, %s396
          %s398 = sadd.s32 %s32, %s31
          %s399 = smul.addr %s398, 64
          %s400 = scalar_lea.hbm %s3, %s399
          %s402 = sshll.u32 %s381, 4
          %s403 = int_to_ptr.vmem [resolvable:$true] %s402
          %405 = dma.vmem_to_hbm [thread:$0]  %s403, 64, %s400, %s378
        $region44: #{tpu_custom_call.1} parent=31 // pred_fallthru
          _
        // Predicated region
        $region45: #{tpu_custom_call.1} parent=31 // pred_check
          %p406 = pneg %p157
        $region46: #{tpu_custom_call.1} parent=31 // pred_check_branch
          %408 = sbr.rel (%p406) target = $region48
        $region47: #{tpu_custom_call.1} parent=31 // pred_region
          %s410 = ssub.s32 64, 64
          %411 = vsyncadd %s383, %s410
          %s412 = sadd.s32 %s32, %s31
          %s413 = smul.addr %s412, 64
          %s414 = scalar_lea.hbm %s4, %s413
          %s416 = sshll.u32 %s386, 4
          %s417 = int_to_ptr.vmem [resolvable:$true] %s416
          %419 = dma.vmem_to_hbm [thread:$0]  %s417, 64, %s414, %s383
        $region48: #{tpu_custom_call.1} parent=31 // pred_fallthru
          _
        // Predicated region
        $region49: #{tpu_custom_call.1} parent=31 // pred_check
          %p420 = pneg %p185
        $region50: #{tpu_custom_call.1} parent=31 // pred_check_branch
          %422 = sbr.rel (%p420) target = $region52
        $region51: #{tpu_custom_call.1} parent=31 // pred_region
          %s424 = ssub.s32 64, 64
          %425 = vsyncadd %s388, %s424
          %s426 = sadd.s32 %s32, %s31
          %s427 = smul.addr %s426, 64
          %s428 = scalar_lea.hbm %s5, %s427
          %s430 = sshll.u32 %s391, 4
          %s431 = int_to_ptr.vmem [resolvable:$true] %s430
          %433 = dma.vmem_to_hbm [thread:$0]  %s431, 64, %s428, %s388
        $region52: #{tpu_custom_call.1} parent=31 // pred_fallthru
          _
      $region32: #{tpu_custom_call.1} parent=5 // pred_fallthru
        _
      %p434 = scmp.le.s32.totalorder 2, %s22
      // Predicated region
      $region53: #{tpu_custom_call.1} parent=5 // pred_check
        %p435 = pneg %p434
      $region54: #{tpu_custom_call.1} parent=5 // pred_check_branch
        %437 = sbr.rel (%p435) target = $region56
      $region55: #{tpu_custom_call.1} parent=5 // pred_region
        %s438 = ssub.s32 %s22, 2
        // Predicated region
        $region57: #{tpu_custom_call.1} parent=55 // pred_check
          %p439 = pneg %p135
        $region58: #{tpu_custom_call.1} parent=55 // pred_check_branch
          %441 = sbr.rel (%p439) target = $region60
        $region59: #{tpu_custom_call.1} parent=55 // pred_region
          %s442 = sand.u32 %s120, 1
          %s443 = scalar_lea.sflag [#allocation4], %s442
          %s444 = sand.u32 %s120, 1
          %s445 = smul.addr %s444, 4
          %s446 = scalar_lea.vmem [#allocation7], %s445
          %447 = dma.done %s443, 64
        $region60: #{tpu_custom_call.1} parent=55 // pred_fallthru
          _
        // Predicated region
        $region61: #{tpu_custom_call.1} parent=55 // pred_check
          %p448 = pneg %p163
        $region62: #{tpu_custom_call.1} parent=55 // pred_check_branch
          %450 = sbr.rel (%p448) target = $region64
        $region63: #{tpu_custom_call.1} parent=55 // pred_region
          %s451 = sand.u32 %s28, 1
          %s452 = scalar_lea.sflag [#allocation9], %s451
          %s453 = sand.u32 %s148, 1
          %s454 = smul.addr %s453, 4
          %s455 = scalar_lea.vmem [#allocation8], %s454
          %456 = dma.done %s452, 64
        $region64: #{tpu_custom_call.1} parent=55 // pred_fallthru
          _
        // Predicated region
        $region65: #{tpu_custom_call.1} parent=55 // pred_check
          %p457 = pneg %p191
        $region66: #{tpu_custom_call.1} parent=55 // pred_check_branch
          %459 = sbr.rel (%p457) target = $region68
        $region67: #{tpu_custom_call.1} parent=55 // pred_region
          %s460 = sand.u32 %s28, 1
          %s461 = scalar_lea.sflag [#allocation9], %s460
          %s462 = sand.u32 %s176, 1
          %s463 = smul.addr %s462, 4
          %s464 = scalar_lea.vmem [#allocation10], %s463
          %465 = dma.done %s461, 64
        $region68: #{tpu_custom_call.1} parent=55 // pred_fallthru
          _
      $region56: #{tpu_custom_call.1} parent=5 // pred_fallthru
        _
    $region6: #{tpu_custom_call.1} parent=1 // loop_footer
      %s26 = sadd.s32 1, %s22
    $region7: #{tpu_custom_call.1} parent=1 // loop_footer_branch
      %21 = sbr.rel target = $region3
    $region8: #{tpu_custom_call.1} parent=1 // loop_exit
      _
    %466 = vsyncpa [#allocation3], 1
    %s467 = scalar_lea.sflag [#allocation3], 1
    %468 = vsyncpa %s467, 1
    %469 = vsyncpa [#allocation6], 1
    %470 = vsyncpa [#allocation4], 1
    %s471 = scalar_lea.sflag [#allocation4], 1
    %472 = vsyncpa %s471, 1
    %473 = vsyncpa [#allocation9], 1
    %s474 = scalar_lea.sflag [#allocation9], 1
    %475 = vsyncpa %s474, 1

// kernel: tpu_custom_call.1
$region0: #{tpu_custom_call.1}
  #allocation0 [shape = 'u32[]', space=smem, size = 0x4, offset = 0x4, fixed_abs, tag = 'smem constant byte address 0x4 - core index']
  #allocation1 [shape = 'u32[144,128]{1,0:T(1,128)}', space=vmem, size = 0x12000, scoped, tag = 'internal scratch']
  %s0 = inlined_call_operand.hbm [shape: bf16[2,8,32], index: 0, kind: input, shape index: {}]
  %s1 = inlined_call_operand.hbm [shape: bf16[32,96], index: 1, kind: input, shape index: {}]
  %s2 = inlined_call_operand.vmem [shape: f32[1,96], index: 2, kind: input, shape index: {}]
  %s3 = inlined_call_operand.hbm [shape: bf16[2,8,32], index: 3, kind: output, shape index: {0}]
  %s4 = inlined_call_operand.hbm [shape: bf16[2,8,32], index: 4, kind: output, shape index: {1}]
  %s5 = inlined_call_operand.hbm [shape: bf16[2,8,32], index: 5, kind: output, shape index: {2}]
  %6 = xla_tuple %s3, %s4, %s5
  %s7 = sld [smem:[#allocation0]]
  $region69: #{tpu_custom_call.1} parent=0
    _
  %s9 = ssub.s32 1, %s7
  %s10 = scalar_select 0, %s9, %s7
  $region1: #{tpu_custom_call.1} parent=0
    #allocation2 [shape = 'u8[4096]{0}', space=vmem, size = 0x1000, scoped, tag = 'input window, operand 0']
    #allocation3 [shape = 's32[2]{0}', space=sflag, size = 0x8, scoped, tag = 'scoped memory for tpu_custom_call.1']
    #allocation4 [shape = 's32[2]{0}', space=sflag, size = 0x8, scoped, tag = 'scoped memory for tpu_custom_call.1']
    #allocation5 [shape = 'u8[8192]{0}', space=vmem, size = 0x2000, scoped, tag = 'input window, operand 1, single buffered']
    #allocation6 [shape = 's32[1]{0}', space=sflag, size = 0x4, scoped, tag = 'scoped memory for tpu_custom_call.1']
    #allocation7 [shape = 'u8[4096]{0}', space=vmem, size = 0x1000, scoped, tag = 'output window, operand 0']
    #allocation8 [shape = 'u8[4096]{0}', space=vmem, size = 0x1000, scoped, tag = 'output window, operand 1']
    #allocation9 [shape = 's32[2]{0}', space=sflag, size = 0x8, scoped, tag = 'scoped memory for tpu_custom_call.1']
    #allocation10 [shape = 'u8[4096]{0}', space=vmem, size = 0x1000, scoped, tag = 'output window, operand 2']
    %11 = vsyncpa [#allocation3], 0
    %s12 = scalar_lea.sflag [#allocation3], 1
    %13 = vsyncpa %s12, 0
    %14 = vsyncpa [#allocation6], 0
    %15 = vsyncpa [#allocation4], 0
    %s16 = scalar_lea.sflag [#allocation4], 1
    %17 = vsyncpa %s16, 0
    %18 = vsyncpa [#allocation9], 0
    %s19 = scalar_lea.sflag [#allocation9], 1
    %20 = vsyncpa %s19, 0
    loop: start=0, step=1, limit=4
    $region2: #{tpu_custom_call.1} parent=1 // loop_pre_header
      _
    $region3: #{tpu_custom_call.1} parent=1 // loop_header
      %s22 = sphi 0, %s26
      %p23 = scmp.ge.s32.totalorder %s22, 4
      %s29 = sphi 0, %s41
      %s30 = sphi 0, %s37
      %s31 = sphi 0, %s29
      %s32 = sphi 0, %s30
      %s33 = sphi 0, %s31
      %s34 = sphi 0, %s32
      %s46 = sphi 0, %s48
      %s49 = sphi 0, %s46
      %s50 = sphi 0, %s49
      %s66 = sphi 0, %s50
      %s70 = sphi 0, %s70
      %s72 = sphi 0, %s70
      %s73 = sphi 0, %s72
      %s87 = sphi 0, %s73
      %s91 = sphi 0, %s91
      %s93 = sphi 0, %s91
      %s94 = sphi 0, %s93
      %s108 = sphi 0, %s94
      %s116 = sphi 0, %s118
      %s119 = sphi 0, %s116
      %s120 = sphi 0, %s119
      %s136 = sphi 0, %s120
      %s144 = sphi 0, %s146
      %s147 = sphi 0, %s144
      %s148 = sphi 0, %s147
      %s164 = sphi 0, %s148
      %s172 = sphi 0, %s174
      %s175 = sphi 0, %s172
      %s176 = sphi 0, %s175
      %s192 = sphi 0, %s176
    $region4: #{tpu_custom_call.1} parent=1 // loop_header_branch
      %25 = sbr.rel (%p23) target = $region8
    $region5: #{tpu_custom_call.1} parent=1 // loop_body
      %s27 = ssub.s32 %s22, 1
      %s28 = ssub.s32 %s22, 2
      %s35 = sadd.s32 1, %s30
      %p36 = scmp.ge.s32.totalorder %s35, 1
      %s37 = scalar_select %p36, 0, %s35
      %s38 = sadd.s32 1, %s29
      %s39 = scalar_select %p36, %s38, %s29
      %p40 = scmp.ge.s32.totalorder %s39, 2
      %s41 = scalar_select %p40, 0, %s39
      %s42 = ssub.s32 %s29, %s41
      %s43 = ssub.s32 %s30, %s37
      %s44 = sor.u32 %s42, %s43
      %p45 = scmp.eq.s32.totalorder %s44, 0
      %s47 = sadd.s32 %s46, 1
      %s48 = scalar_select %p45, %s46, %s47
      %p51 = pneg %p45
      %p52 = scmp.eq.s32.totalorder %s22, 1
      %p53 = por %p51, %p52
      %p54 = scmp.ne.s32.totalorder %s46, %s49
      %p55 = scmp.eq.s32.totalorder %s22, 0
      %p56 = por %p54, %p55
      %p57 = scmp.ne.s32.totalorder %s46, %s49
      %p58 = scmp.eq.s32.totalorder %s27, 1
      %p59 = por %p57, %p58
      %p60 = scmp.ne.s32.totalorder %s49, %s50
      %p61 = scmp.eq.s32.totalorder %s27, 0
      %p62 = por %p60, %p61
      %p63 = scmp.ne.s32.totalorder %s49, %s50
      %p64 = scmp.eq.s32.totalorder %s28, 1
      %p65 = por %p63, %p64
      %p67 = scmp.ne.s32.totalorder %s50, %s66
      %p68 = scmp.eq.s32.totalorder %s28, 0
      %p69 = por %p67, %p68
      %s71 = sadd.s32 %s70, 1
      %p74 = scmp.eq.s32.totalorder %s22, 1
      %p75 = scmp.ne.s32.totalorder %s70, %s72
      %p76 = scmp.eq.s32.totalorder %s22, 0
      %p77 = por %p75, %p76
      %p78 = scmp.ne.s32.totalorder %s70, %s72
      %p79 = scmp.eq.s32.totalorder %s27, 1
      %p80 = por %p78, %p79
      %p81 = scmp.ne.s32.totalorder %s72, %s73
      %p82 = scmp.eq.s32.totalorder %s27, 0
      %p83 = por %p81, %p82
      %p84 = scmp.ne.s32.totalorder %s72, %s73
      %p85 = scmp.eq.s32.totalorder %s28, 1
      %p86 = por %p84, %p85
      %p88 = scmp.ne.s32.totalorder %s73, %s87
      %p89 = scmp.eq.s32.totalorder %s28, 0
      %p90 = por %p88, %p89
      %s92 = sadd.s32 %s91, 1
      %p95 = scmp.eq.s32.totalorder %s22, 1
      %p96 = scmp.ne.s32.totalorder %s91, %s93
      %p97 = scmp.eq.s32.totalorder %s22, 0
      %p98 = por %p96, %p97
      %p99 = scmp.ne.s32.totalorder %s91, %s93
      %p100 = scmp.eq.s32.totalorder %s27, 1
      %p101 = por %p99, %p100
      %p102 = scmp.ne.s32.totalorder %s93, %s94
      %p103 = scmp.eq.s32.totalorder %s27, 0
      %p104 = por %p102, %p103
      %p105 = scmp.ne.s32.totalorder %s93, %s94
      %p106 = scmp.eq.s32.totalorder %s28, 1
      %p107 = por %p105, %p106
      %p109 = scmp.ne.s32.totalorder %s94, %s108
      %p110 = scmp.eq.s32.totalorder %s28, 0
      %p111 = por %p109, %p110
      %s112 = ssub.s32 %s29, %s41
      %s113 = ssub.s32 %s30, %s37
      %s114 = sor.u32 %s112, %s113
      %p115 = scmp.eq.s32.totalorder %s114, 0
      %s117 = sadd.s32 %s116, 1
      %s118 = scalar_select %p115, %s116, %s117
      %p121 = pneg %p115
      %p122 = scmp.eq.s32.totalorder %s22, 1
      %p123 = por %p121, %p122
      %p124 = scmp.ne.s32.totalorder %s116, %s119
      %p125 = scmp.eq.s32.totalorder %s22, 0
      %p126 = por %p124, %p125
      %p127 = scmp.ne.s32.totalorder %s116, %s119
      %p128 = scmp.eq.s32.totalorder %s27, 1
      %p129 = por %p127, %p128
      %p130 = scmp.ne.s32.totalorder %s119, %s120
      %p131 = scmp.eq.s32.totalorder %s27, 0
      %p132 = por %p130, %p131
      %p133 = scmp.ne.s32.totalorder %s119, %s120
      %p134 = scmp.eq.s32.totalorder %s28, 1
      %p135 = por %p133, %p134
      %p137 = scmp.ne.s32.totalorder %s120, %s136
      %p138 = scmp.eq.s32.totalorder %s28, 0
      %p139 = por %p137, %p138
      %s140 = ssub.s32 %s29, %s41
      %s141 = ssub.s32 %s30, %s37
      %s142 = sor.u32 %s140, %s141
      %p143 = scmp.eq.s32.totalorder %s142, 0
      %s145 = sadd.s32 %s144, 1
      %s146 = scalar_select %p143, %s144, %s145
      %p149 = pneg %p143
      %p150 = scmp.eq.s32.totalorder %s22, 1
      %p151 = por %p149, %p150
      %p152 = scmp.ne.s32.totalorder %s144, %s147
      %p153 = scmp.eq.s32.totalorder %s22, 0
      %p154 = por %p152, %p153
      %p155 = scmp.ne.s32.totalorder %s144, %s147
      %p156 = scmp.eq.s32.totalorder %s27, 1
      %p157 = por %p155, %p156
      %p158 = scmp.ne.s32.totalorder %s147, %s148
      %p159 = scmp.eq.s32.totalorder %s27, 0
      %p160 = por %p158, %p159
      %p161 = scmp.ne.s32.totalorder %s147, %s148
      %p162 = scmp.eq.s32.totalorder %s28, 1
      %p163 = por %p161, %p162
      %p165 = scmp.ne.s32.totalorder %s148, %s164
      %p166 = scmp.eq.s32.totalorder %s28, 0
      %p167 = por %p165, %p166
      %s168 = ssub.s32 %s29, %s41
      %s169 = ssub.s32 %s30, %s37
      %s170 = sor.u32 %s168, %s169
      %p171 = scmp.eq.s32.totalorder %s170, 0
      %s173 = sadd.s32 %s172, 1
      %s174 = scalar_select %p171, %s172, %s173
      %p177 = pneg %p171
      %p178 = scmp.eq.s32.totalorder %s22, 1
      %p179 = por %p177, %p178
      %p180 = scmp.ne.s32.totalorder %s172, %s175
      %p181 = scmp.eq.s32.totalorder %s22, 0
      %p182 = por %p180, %p181
      %p183 = scmp.ne.s32.totalorder %s172, %s175
      %p184 = scmp.eq.s32.totalorder %s27, 1
      %p185 = por %p183, %p184
      %p186 = scmp.ne.s32.totalorder %s175, %s176
      %p187 = scmp.eq.s32.totalorder %s27, 0
      %p188 = por %p186, %p187
      %p189 = scmp.ne.s32.totalorder %s175, %s176
      %p190 = scmp.eq.s32.totalorder %s28, 1
      %p191 = por %p189, %p190
      %p193 = scmp.ne.s32.totalorder %s176, %s192
      %p194 = scmp.eq.s32.totalorder %s28, 0
      %p195 = por %p193, %p194
      %p196 = scmp.le.s32.totalorder 1, %s22
      %p197 = scmp.lt.s32.totalorder %s22, 3
      %p198 = pnand %p196, %p197
      %p199 = pneg %p198
      // Predicated region
      $region9: #{tpu_custom_call.1} parent=5 // pred_check
        _
      $region10: #{tpu_custom_call.1} parent=5 // pred_check_branch
        %201 = sbr.rel (%p198) target = $region12
      $region11: #{tpu_custom_call.1} parent=5 // pred_region
        %s202 = ssub.s32 %s22, 1
        // Predicated region
        $region13: #{tpu_custom_call.1} parent=11 // pred_check
          %p203 = pneg %p83
        $region14: #{tpu_custom_call.1} parent=11 // pred_check_branch
          %205 = sbr.rel (%p203) target = $region16
        $region15: #{tpu_custom_call.1} parent=11 // pred_region
          %s207 = ssub.s32 256, 256
          %208 = vsyncadd [#allocation6], %s207
          %s209 = sshll.u32 [#allocation5], 4
          %s210 = int_to_ptr.vmem [resolvable:$true] %s209
          %215 = dma.hbm_to_vmem [thread:$0]  %s1, 256, %s210, [#allocation6], 64, 64, 4
        $region16: #{tpu_custom_call.1} parent=11 // pred_fallthru
          _
        // Predicated region
        $region17: #{tpu_custom_call.1} parent=11 // pred_check
          %p216 = pneg %p104
        $region18: #{tpu_custom_call.1} parent=11 // pred_check_branch
          %218 = sbr.rel (%p216) target = $region20
        $region19: #{tpu_custom_call.1} parent=11 // pred_region
          _
        $region20: #{tpu_custom_call.1} parent=11 // pred_fallthru
          _
      $region12: #{tpu_custom_call.1} parent=5 // pred_fallthru
        _
      %p219 = scmp.lt.s32.totalorder %s22, 2
      // Predicated region
      $region21: #{tpu_custom_call.1} parent=5 // pred_check
        %p220 = pneg %p219
      $region22: #{tpu_custom_call.1} parent=5 // pred_check_branch
        %222 = sbr.rel (%p220) target = $region24
      $region23: #{tpu_custom_call.1} parent=5 // pred_region
        // Predicated region
        $region25: #{tpu_custom_call.1} parent=23 // pred_check
          %p223 = pneg %p56
        $region26: #{tpu_custom_call.1} parent=23 // pred_check_branch
          %225 = sbr.rel (%p223) target = $region28
        $region27: #{tpu_custom_call.1} parent=23 // pred_region
          %s226 = sand.u32 %s46, 1
          %s227 = scalar_lea.sflag [#allocation3], %s226
          %s228 = sand.u32 %s46, 1
          %s229 = smul.addr %s228, 4
          %s230 = scalar_lea.vmem [#allocation2], %s229
          %s232 = ssub.s32 64, 64
          %233 = vsyncadd %s227, %s232
          %s234 = sadd.s32 %s30, %s29
          %s235 = smul.addr %s234, 64
          %s236 = scalar_lea.hbm %s0, %s235
          %s238 = sshll.u32 %s230, 4
          %s239 = int_to_ptr.vmem [resolvable:$true] %s238
          %241 = dma.hbm_to_vmem [thread:$0]  %s236, 64, %s239, %s227
        $region28: #{tpu_custom_call.1} parent=23 // pred_fallthru
          _
      $region24: #{tpu_custom_call.1} parent=5 // pred_fallthru
        _
      %p242 = scmp.le.s32.totalorder 1, %s22
      %p243 = scmp.lt.s32.totalorder %s22, 3
      %p244 = pnand %p242, %p243
      %p245 = pneg %p244
      // Predicated region
      $region29: #{tpu_custom_call.1} parent=5 // pred_check
        _
      $region30: #{tpu_custom_call.1} parent=5 // pred_check_branch
        %247 = sbr.rel (%p244) target = $region32
      $region31: #{tpu_custom_call.1} parent=5 // pred_region
        %s248 = ssub.s32 %s22, 1
        %s249 = sand.u32 %s49, 1
        %s250 = scalar_lea.sflag [#allocation3], %s249
        %s251 = sand.u32 %s49, 1
        %s252 = smul.addr %s251, 4
        %s253 = scalar_lea.vmem [#allocation2], %s252
        // Predicated region
        $region33: #{tpu_custom_call.1} parent=31 // pred_check
          %p254 = pneg %p62
        $region34: #{tpu_custom_call.1} parent=31 // pred_check_branch
          %256 = sbr.rel (%p254) target = $region36
        $region35: #{tpu_custom_call.1} parent=31 // pred_region
          %257 = dma.done %s250, 64
        $region36: #{tpu_custom_call.1} parent=31 // pred_fallthru
          _
        // Predicated region
        $region37: #{tpu_custom_call.1} parent=31 // pred_check
          %p258 = pneg %p83
        $region38: #{tpu_custom_call.1} parent=31 // pred_check_branch
          %260 = sbr.rel (%p258) target = $region40
        $region39: #{tpu_custom_call.1} parent=31 // pred_region
          %261 = dma.done [#allocation6], 256
        $region40: #{tpu_custom_call.1} parent=31 // pred_fallthru
          _
        %s262 = sand.u32 %s49, 1
        %s263 = scalar_lea.sflag [#allocation3], %s262
        %s264 = sand.u32 %s49, 1
        %s265 = smul.addr %s264, 4
        %s266 = scalar_lea.vmem [#allocation2], %s265
        %p267 = pneg %p62
        %p268 = pneg %p59
        %p269 = pneg %p83
        %p270 = pneg %p80
        %p271 = pneg %p104
        %p272 = pneg %p101
        %p273 = pneg %p132
        %p274 = pneg %p129
        %s275 = sand.u32 %s119, 1
        %s276 = scalar_lea.sflag [#allocation4], %s275
        %s277 = sand.u32 %s119, 1
        %s278 = smul.addr %s277, 4
        %s279 = scalar_lea.vmem [#allocation7], %s278
        %p280 = pneg %p160
        %p281 = pneg %p157
        %s282 = sand.u32 %s27, 1
        %s283 = scalar_lea.sflag [#allocation9], %s282
        %s284 = sand.u32 %s147, 1
        %s285 = smul.addr %s284, 4
        %s286 = scalar_lea.vmem [#allocation8], %s285
        %p287 = pneg %p188
        %p288 = pneg %p185
        %s289 = sand.u32 %s27, 1
        %s290 = scalar_lea.sflag [#allocation9], %s289
        %s291 = sand.u32 %s175, 1
        %s292 = smul.addr %s291, 4
        %s293 = scalar_lea.vmem [#allocation10], %s292
        %v295 = vld [vmem:[%s253] sm:$0xf]
        %v296 = vld [vmem:[#allocation5] sm:$0xf]
        %v297 = vld [vmem:[#allocation5 + $0x4] sm:$0xf]
        %v298 = vld [vmem:[#allocation5 + $0x8] sm:$0xf]
        %v299 = vld [vmem:[#allocation5 + $0xc] sm:$0xf]
        %v300 = vld [vmem:[%s2] sm:$0x1]
        %v302 = vlaneseq
        %v303 = vshrl.u32 %v302, 7
        %v304 = vsub.s32 0, %v303
        %v305 = vrot.slane %v300, %v304
        %v311 = vunpack.c.l.b16 %v296
        %v312 = vunpack.c.l.b16 %v297
        %v313 = vunpack.c.l.b16 %v298
        %v314 = vunpack.c.l.b16 %v299
        %v315 = vpack.c.b16 %v312, %v311
        %v316 = vpack.c.b16 %v314, %v313
        %vm319 = vcmask 261120
        %v321 = vsel %vm319, %v295, 0
        %323 = vmatprep.subr.bf16.mxu0 0
        %324 = vmatpush1.bf16.msra.mxu0 0
        %325 = vmatprep.subr.bf16.mxu0 0
        %326 = vmatpush1.bf16.msra.mxu0 0
        %327 = vmatprep.subr.bf16.mxu0 0
        %328 = vmatpush1.bf16.msra.mxu0 0
        %329 = vmatprep.subr.bf16.mxu0 0
        %330 = vmatpush1.bf16.msra.mxu0 0
        %331 = vmatprep.subr.bf16.mxu0 0
        %332 = vmatpush1.bf16.msra.mxu0 0
        %333 = vmatprep.subr.bf16.mxu0 0
        %334 = vmatpush1.bf16.msra.mxu0 0
        %335 = vmatprep.subr.bf16.mxu0 0
        %336 = vmatpush1.bf16.msra.mxu0 %v316
        %337 = vmatprep.subr.bf16.mxu0 0
        %338 = vmatpush1.bf16.msra.mxu0 %v315
        %339 = vmatprep.subr.bf16.mxu0 0
        %340 = vmatpush2.bf16.msra.mxu0 0
        %341 = vmatprep.subr.bf16.mxu0 0
        %342 = vmatpush2.bf16.msra.mxu0 0
        %343 = vmatprep.subr.bf16.mxu0 0
        %344 = vmatpush2.bf16.msra.mxu0 0
        %345 = vmatprep.subr.bf16.mxu0 0
        %346 = vmatpush2.bf16.msra.mxu0 0
        %347 = vmatprep.subr.bf16.mxu0 0
        %348 = vmatpush2.bf16.msra.mxu0 0
        %349 = vmatprep.subr.bf16.mxu0 0
        %350 = vmatpush2.bf16.msra.mxu0 0
        %351 = vmatprep.subr.bf16.mxu0 0
        %352 = vmatpush2.bf16.msra.mxu0 0
        %353 = vmatprep.subr.bf16.mxu0 0
        %354 = vmatpush2.bf16.msra.mxu0 0
        %355 = vmatprep.mubr.bf16.mxu0 0
        %356 = vmatmul.mubr.bf16.gmra.mxu0 %v321
        %v357 = vpop.f32.mrf.mxu0
        %v358 = vadd.f32 %v305, %v357
        %v359 = vpop.f32.mrf.mxu0
        %v360 = vpop.f32.mrf.mxu0
        %v361 = vpop.f32.mrf.mxu0
        %362 = vdwg.mxu0
        %v363 = vpack.c.bf16 %v358, %v358
        %vm364 = vcmask 257024
        %365 = vst.msk [vmem:[%s279] sm:$0xf] %vm364, %v363
        %v367 = vunpack.c.l.b16 %v363
        %v368 = vpack.c.b16 %v367, %v367
        %369 = vrot.lane.b32.xlu0 %v368, 96
        %v370 = vpop.permute.xlu0 %369
        %372 = vst.msk [vmem:[%s286] sm:$0xf] %vm364, %v370
        %373 = vrot.lane.b32.xlu0 %v368, 64
        %v374 = vpop.permute.xlu0 %373
        %376 = vst.msk [vmem:[%s293] sm:$0xf] %vm364, %v374
        %s377 = sand.u32 %s119, 1
        %s378 = scalar_lea.sflag [#allocation4], %s377
        %s379 = sand.u32 %s119, 1
        %s380 = smul.addr %s379, 4
        %s381 = scalar_lea.vmem [#allocation7], %s380
        %s382 = sand.u32 %s27, 1
        %s383 = scalar_lea.sflag [#allocation9], %s382
        %s384 = sand.u32 %s147, 1
        %s385 = smul.addr %s384, 4
        %s386 = scalar_lea.vmem [#allocation8], %s385
        %s387 = sand.u32 %s27, 1
        %s388 = scalar_lea.sflag [#allocation9], %s387
        %s389 = sand.u32 %s175, 1
        %s390 = smul.addr %s389, 4
        %s391 = scalar_lea.vmem [#allocation10], %s390
        // Predicated region
        $region41: #{tpu_custom_call.1} parent=31 // pred_check
          %p392 = pneg %p129
        $region42: #{tpu_custom_call.1} parent=31 // pred_check_branch
          %394 = sbr.rel (%p392) target = $region44
        $region43: #{tpu_custom_call.1} parent=31 // pred_region
          %s396 = ssub.s32 64, 64
          %397 = vsyncadd %s378, %s396
          %s398 = sadd.s32 %s32, %s31
          %s399 = smul.addr %s398, 64
          %s400 = scalar_lea.hbm %s3, %s399
          %s402 = sshll.u32 %s381, 4
          %s403 = int_to_ptr.vmem [resolvable:$true] %s402
          %405 = dma.vmem_to_hbm [thread:$0]  %s403, 64, %s400, %s378
        $region44: #{tpu_custom_call.1} parent=31 // pred_fallthru
          _
        // Predicated region
        $region45: #{tpu_custom_call.1} parent=31 // pred_check
          %p406 = pneg %p157
        $region46: #{tpu_custom_call.1} parent=31 // pred_check_branch
          %408 = sbr.rel (%p406) target = $region48
        $region47: #{tpu_custom_call.1} parent=31 // pred_region
          %s410 = ssub.s32 64, 64
          %411 = vsyncadd %s383, %s410
          %s412 = sadd.s32 %s32, %s31
          %s413 = smul.addr %s412, 64
          %s414 = scalar_lea.hbm %s4, %s413
          %s416 = sshll.u32 %s386, 4
          %s417 = int_to_ptr.vmem [resolvable:$true] %s416
          %419 = dma.vmem_to_hbm [thread:$0]  %s417, 64, %s414, %s383
        $region48: #{tpu_custom_call.1} parent=31 // pred_fallthru
          _
        // Predicated region
        $region49: #{tpu_custom_call.1} parent=31 // pred_check
          %p420 = pneg %p185
        $region50: #{tpu_custom_call.1} parent=31 // pred_check_branch
          %422 = sbr.rel (%p420) target = $region52
        $region51: #{tpu_custom_call.1} parent=31 // pred_region
          %s424 = ssub.s32 64, 64
          %425 = vsyncadd %s388, %s424
          %s426 = sadd.s32 %s32, %s31
          %s427 = smul.addr %s426, 64
          %s428 = scalar_lea.hbm %s5, %s427
          %s430 = sshll.u32 %s391, 4
          %s431 = int_to_ptr.vmem [resolvable:$true] %s430
          %433 = dma.vmem_to_hbm [thread:$0]  %s431, 64, %s428, %s388
        $region52: #{tpu_custom_call.1} parent=31 // pred_fallthru
          _
      $region32: #{tpu_custom_call.1} parent=5 // pred_fallthru
        _
      %p434 = scmp.le.s32.totalorder 2, %s22
      // Predicated region
      $region53: #{tpu_custom_call.1} parent=5 // pred_check
        %p435 = pneg %p434
      $region54: #{tpu_custom_call.1} parent=5 // pred_check_branch
        %437 = sbr.rel (%p435) target = $region56
      $region55: #{tpu_custom_call.1} parent=5 // pred_region
        %s438 = ssub.s32 %s22, 2
        // Predicated region
        $region57: #{tpu_custom_call.1} parent=55 // pred_check
          %p439 = pneg %p135
        $region58: #{tpu_custom_call.1} parent=55 // pred_check_branch
          %441 = sbr.rel (%p439) target = $region60
        $region59: #{tpu_custom_call.1} parent=55 // pred_region
          %s442 = sand.u32 %s120, 1
          %s443 = scalar_lea.sflag [#allocation4], %s442
          %s444 = sand.u32 %s120, 1
          %s445 = smul.addr %s444, 4
          %s446 = scalar_lea.vmem [#allocation7], %s445
          %447 = dma.done %s443, 64
        $region60: #{tpu_custom_call.1} parent=55 // pred_fallthru
          _
        // Predicated region
        $region61: #{tpu_custom_call.1} parent=55 // pred_check
          %p448 = pneg %p163
        $region62: #{tpu_custom_call.1} parent=55 // pred_check_branch
          %450 = sbr.rel (%p448) target = $region64
        $region63: #{tpu_custom_call.1} parent=55 // pred_region
          %s451 = sand.u32 %s28, 1
          %s452 = scalar_lea.sflag [#allocation9], %s451
          %s453 = sand.u32 %s148, 1
          %s454 = smul.addr %s453, 4
          %s455 = scalar_lea.vmem [#allocation8], %s454
          %456 = dma.done %s452, 64
        $region64: #{tpu_custom_call.1} parent=55 // pred_fallthru
          _
        // Predicated region
        $region65: #{tpu_custom_call.1} parent=55 // pred_check
          %p457 = pneg %p191
        $region66: #{tpu_custom_call.1} parent=55 // pred_check_branch
          %459 = sbr.rel (%p457) target = $region68
        $region67: #{tpu_custom_call.1} parent=55 // pred_region
          %s460 = sand.u32 %s28, 1
          %s461 = scalar_lea.sflag [#allocation9], %s460
          %s462 = sand.u32 %s176, 1
          %s463 = smul.addr %s462, 4
          %s464 = scalar_lea.vmem [#allocation10], %s463
          %465 = dma.done %s461, 64
        $region68: #{tpu_custom_call.1} parent=55 // pred_fallthru
          _
      $region56: #{tpu_custom_call.1} parent=5 // pred_fallthru
        _
    $region6: #{tpu_custom_call.1} parent=1 // loop_footer
      %s26 = sadd.s32 1, %s22
    $region7: #{tpu_custom_call.1} parent=1 // loop_footer_branch
      %21 = sbr.rel target = $region3
    $region8: #{tpu_custom_call.1} parent=1 // loop_exit
      _
    %466 = vsyncpa [#allocation3], 1
    %s467 = scalar_lea.sflag [#allocation3], 1
    %468 = vsyncpa %s467, 1
    %469 = vsyncpa [#allocation6], 1
    %470 = vsyncpa [#allocation4], 1
    %s471 = scalar_lea.sflag [#allocation4], 1
    %472 = vsyncpa %s471, 1
    %473 = vsyncpa [#allocation9], 1
    %s474 = scalar_lea.sflag [#allocation9], 1
    %475 = vsyncpa %s474, 1

</llo_original>
